<compile_context>
chip_gen: v6e
topology: v6e:2x2x1
jax: 0.10.0
libtpu: 0.0.40
codegen_flags: <defaults>
</compile_context>

<pallas_src>
import numpy as np
import jax
import jax.numpy as jnp
from jax.experimental import pallas as pl
from jax.experimental.pallas import tpu as pltpu


_SQRT_2PI = float(np.sqrt(2.0 * np.pi))


def _round_up(x: int, m: int) -> int:
    return ((x + m - 1) // m) * m


# ---------------------------------------------------------------------------
# Fused kernel:
#   h      = relu(x @ W1 + b1)
#   [m|z]  = h @ [W2|W3] + [b2|b3]
#   std    = softplus(z)
#   latent = m + eps * std
#   logp   = sum_valid( -log(std*sqrt(2pi)) - eps^2/2 )
# ---------------------------------------------------------------------------
def _encoder_kernel(x_ref, eps_ref, w1_ref, b1_ref, w23_ref, b23_ref, mask_ref,
                    latent_ref, logp_ref):
    dl = latent_ref.shape[-1]                     # padded latent width (static)

    x = x_ref[...]                                                # (TB, Din_p)
    h = jnp.maximum(
        jnp.dot(x, w1_ref[...], preferred_element_type=jnp.float32)
        + b1_ref[...], 0.0)                                       # (TB, H_p)

    mo = jnp.dot(h, w23_ref[...], preferred_element_type=jnp.float32) \
         + b23_ref[...]                                           # (TB, 2*Dl_p)
    mean = mo[:, :dl]
    z = mo[:, dl:]

    # numerically-stable softplus using only exp/log (safe Mosaic lowering)
    std = jnp.maximum(z, 0.0) + jnp.log(1.0 + jnp.exp(-jnp.abs(z)))

    eps = eps_ref[...]                                            # (TB, Dl_p)
    noise = eps * std
    latent_ref[...] = mean + noise

    mask = mask_ref[...]                      # (1, Dl_p): 1.0 on real latent dims
    term = (-jnp.log(std * _SQRT_2PI) - 0.5 * eps * eps) * mask
    lp = jnp.sum(term, axis=-1, keepdims=True)                    # (TB, 1)
    # lane-dense store; wrapper reads column 0
    logp_ref[...] = jnp.broadcast_to(lp, logp_ref.shape)


# ---------------------------------------------------------------------------
# Parameter construction / packing
# ---------------------------------------------------------------------------
def init_params(key, dim_context, dim_action_flat, dim_latent, hidden_dim):
    din = dim_context + dim_action_flat
    ks = jax.random.split(key, 6)
    s = 0.1
    return {
        "w1": jax.random.normal(ks[0], (din, hidden_dim), jnp.float32) * s,
        "b1": jax.random.normal(ks[1], (1, hidden_dim), jnp.float32) * s,
        "w2": jax.random.normal(ks[2], (hidden_dim, dim_latent), jnp.float32) * s,
        "b2": jax.random.normal(ks[3], (1, dim_latent), jnp.float32) * s,
        "w3": jax.random.normal(ks[4], (hidden_dim, dim_latent), jnp.float32) * s,
        "b3": jax.random.normal(ks[5], (1, dim_latent), jnp.float32) * s,
        "dim_context": dim_context,
        "dim_action_flat": dim_action_flat,
        "dim_latent": dim_latent,
        "hidden_dim": hidden_dim,
    }


def pack_params(params):
    """Zero-pad to lane-dense shapes and pack fc2/fc3 into one wide matmul."""
    din = params["dim_context"] + params["dim_action_flat"]
    h = params["hidden_dim"]
    dl = params["dim_latent"]
    din_p = _round_up(din, 128)
    h_p = _round_up(h, 128)
    dl_p = _round_up(dl, 128)

    w1p = jnp.zeros((din_p, h_p), jnp.float32).at[:din, :h].set(params["w1"])
    b1p = jnp.zeros((1, h_p), jnp.float32).at[:, :h].set(params["b1"])

    w23p = jnp.zeros((h_p, 2 * dl_p), jnp.float32)
    w23p = w23p.at[:h, :dl].set(params["w2"])
    w23p = w23p.at[:h, dl_p:dl_p + dl].set(params["w3"])
    b23p = jnp.zeros((1, 2 * dl_p), jnp.float32)
    b23p = b23p.at[:, :dl].set(params["b2"])
    b23p = b23p.at[:, dl_p:dl_p + dl].set(params["b3"])

    maskp = jnp.zeros((1, dl_p), jnp.float32).at[:, :dl].set(1.0)

    return {"w1": w1p, "b1": b1p, "w23": w23p, "b23": b23p, "mask": maskp,
            "din": din, "din_pad": din_p, "h_pad": h_p,
            "dim_latent": dl, "dl_pad": dl_p}


# ---------------------------------------------------------------------------
# Wrapper reproducing ContinuousSlateEncoder.forward
# ---------------------------------------------------------------------------
def continuous_slate_encoder_forward(state, action_onehot, eps, packed):
    B = state.shape[0]
    action = action_onehot.reshape(B, -1)
    x = jnp.concatenate([state, action], axis=1).astype(jnp.float32)

    din, din_p = packed["din"], packed["din_pad"]
    h_p = packed["h_pad"]
    dl, dl_p = packed["dim_latent"], packed["dl_pad"]

    tb = min(128, _round_up(B, 8))            # batch tile (>=8 sublanes)
    b_pad = _round_up(B, tb)
    nb = b_pad // tb
    lp_w = 128                                # lane-dense log_prob output width

    x_pad = jnp.zeros((b_pad, din_p), jnp.float32).at[:B, :din].set(x)
    eps_pad = jnp.zeros((b_pad, dl_p), jnp.float32).at[:B, :dl].set(
        eps.astype(jnp.float32))

    # TODO(synk): for production sizes on v6e/v7x, cast x/w1/h/w23 to bfloat16
    # (keep bias add, softplus and log_prob math in f32) for MXU/DMA throughput.
    latent_pad, logp_pad = pl.pallas_call(
        _encoder_kernel,
        out_shape=(jax.ShapeDtypeStruct((b_pad, dl_p), jnp.float32),
                   jax.ShapeDtypeStruct((b_pad, lp_w), jnp.float32)),
        grid=(nb,),
        in_specs=[
            pl.BlockSpec((tb, din_p), lambda i: (i, 0)),      # x
            pl.BlockSpec((tb, dl_p), lambda i: (i, 0)),       # eps
            pl.BlockSpec((din_p, h_p), lambda i: (0, 0)),     # W1
            pl.BlockSpec((1, h_p), lambda i: (0, 0)),         # b1
            pl.BlockSpec((h_p, 2 * dl_p), lambda i: (0, 0)),  # [W2|W3]
            pl.BlockSpec((1, 2 * dl_p), lambda i: (0, 0)),    # [b2|b3]
            pl.BlockSpec((1, dl_p), lambda i: (0, 0)),        # latent mask
        ],
        out_specs=(
            pl.BlockSpec((tb, dl_p), lambda i: (i, 0)),       # latent
            pl.BlockSpec((tb, lp_w), lambda i: (i, 0)),       # log_prob (bcast)
        ),
        compiler_params=pltpu.CompilerParams(
            dimension_semantics=("parallel",)),
    )(x_pad, eps_pad, packed["w1"], packed["b1"],
      packed["w23"], packed["b23"], packed["mask"])

    latent = latent_pad[:B, :dl]
    log_prob = logp_pad[:B, 0]
    return latent, log_prob


# ---------------------------------------------------------------------------
# Pure-JAX reference (same reparameterized eps) for correctness check
# ---------------------------------------------------------------------------
def _reference_forward(state, action_onehot, eps, params):
    B = state.shape[0]
    action = action_onehot.reshape(B, -1)
    x = jnp.concatenate([state, action], axis=1)
    h = jnp.maximum(x @ params["w1"] + params["b1"], 0.0)
    mean = h @ params["w2"] + params["b2"]
    z = h @ params["w3"] + params["b3"]
    std = jnp.maximum(z, 0.0) + jnp.log(1.0 + jnp.exp(-jnp.abs(z)))
    noise = eps * std
    latent = mean + noise
    log_prob = jnp.sum(-jnp.log(std * _SQRT_2PI) - 0.5 * eps * eps, axis=1)
    return latent, log_prob


if __name__ == "__main__":
    # small shapes consistent with the module
    batch = 2
    dim_context = 8
    n_unique_actions = np.array([5, 7, 6], dtype=np.int32)   # slate_size = 3
    dim_latent_abstraction = 16
    hidden_dim = 32

    slate_size = n_unique_actions.shape[0]
    a_max = int(n_unique_actions.max())

    key = jax.random.PRNGKey(0)
    k_state, k_act, k_eps, k_params = jax.random.split(key, 4)

    state = jax.random.normal(k_state, (batch, dim_context), jnp.float32)
    act_idx = jax.random.randint(k_act, (batch, slate_size), 0, a_max)
    action_onehot = jax.nn.one_hot(act_idx, a_max, dtype=jnp.float32)
    eps = jax.random.normal(k_eps, (batch, dim_latent_abstraction), jnp.float32)

    params = init_params(k_params, dim_context, slate_size * a_max,
                         dim_latent_abstraction, hidden_dim)
    packed = pack_params(params)

    latent, log_prob = continuous_slate_encoder_forward(
        state, action_onehot, eps, packed)
    latent = jax.block_until_ready(latent)
    log_prob = jax.block_until_ready(log_prob)

    lat_ref, lp_ref = _reference_forward(state, action_onehot, eps, params)
    np.testing.assert_allclose(np.asarray(latent), np.asarray(lat_ref),
                               rtol=1e-4, atol=1e-5)
    np.testing.assert_allclose(np.asarray(log_prob), np.asarray(lp_ref),
                               rtol=1e-4, atol=1e-5)

    # TODO(synk): calc_latent_prob is not implemented (only forward semantics).
    print("KERNEL_OK")
</pallas_src>

<mosaic_0001>
module attributes {stable_mosaic.version = 11 : i64} {
  func.func @_encoder_kernel(%arg0: i32, %arg1: memref<8x128xf32, #tpu.memory_space<vmem>>, %arg2: memref<8x128xf32, #tpu.memory_space<vmem>>, %arg3: memref<128x128xf32, #tpu.memory_space<vmem>>, %arg4: memref<1x128xf32, #tpu.memory_space<vmem>>, %arg5: memref<128x256xf32, #tpu.memory_space<vmem>>, %arg6: memref<1x256xf32, #tpu.memory_space<vmem>>, %arg7: memref<1x128xf32, #tpu.memory_space<vmem>>, %arg8: memref<8x128xf32, #tpu.memory_space<vmem>>, %arg9: memref<8x128xf32, #tpu.memory_space<vmem>>) attributes {dimension_semantics = [#tpu.dimension_semantics<parallel>], iteration_bounds = array<i64: 1>, scalar_prefetch = 0 : i64, scratch_operands = 0 : i64, tpu.core_type = #tpu.core_type<tc>, window_params = [{transform_indices = @transform_0, window_bounds = array<i64: 8, 128>}, {transform_indices = @transform_1, window_bounds = array<i64: 8, 128>}, {pipeline_mode = #tpu.pipeline_mode<synchronous>, transform_indices = @transform_2, window_bounds = array<i64: 128, 128>}, {pipeline_mode = #tpu.pipeline_mode<synchronous>, transform_indices = @transform_3, window_bounds = array<i64: 1, 128>}, {pipeline_mode = #tpu.pipeline_mode<synchronous>, transform_indices = @transform_4, window_bounds = array<i64: 128, 256>}, {pipeline_mode = #tpu.pipeline_mode<synchronous>, transform_indices = @transform_5, window_bounds = array<i64: 1, 256>}, {pipeline_mode = #tpu.pipeline_mode<synchronous>, transform_indices = @transform_6, window_bounds = array<i64: 1, 128>}, {transform_indices = @transform_7, window_bounds = array<i64: 8, 128>}, {transform_indices = @transform_8, window_bounds = array<i64: 8, 128>}]} {
    %c0 = arith.constant 0 : index
    %c0_0 = arith.constant 0 : index
    %0 = vector.load %arg1[%c0, %c0_0] : memref<8x128xf32, #tpu.memory_space<vmem>>, vector<8x128xf32>
    %c0_1 = arith.constant 0 : index
    %c0_2 = arith.constant 0 : index
    %1 = vector.load %arg3[%c0_1, %c0_2] : memref<128x128xf32, #tpu.memory_space<vmem>>, vector<128x128xf32>
    %cst = arith.constant dense<0.000000e+00> : vector<8x128xf32>
    %2 = tpu.matmul %0, %1, %cst {dimension_numbers = #tpu.dot_dimension_numbers<[1], [0], [0], [1], [0, 0, 1, 1], [], []>} : vector<8x128xf32>, vector<128x128xf32>, vector<8x128xf32> -> vector<8x128xf32>
    %c0_3 = arith.constant 0 : index
    %c0_4 = arith.constant 0 : index
    %3 = vector.load %arg4[%c0_3, %c0_4] : memref<1x128xf32, #tpu.memory_space<vmem>>, vector<1x128xf32>
    %4 = vector.broadcast %3 : vector<1x128xf32> to vector<8x128xf32>
    %5 = arith.addf %2, %4 : vector<8x128xf32>
    %cst_5 = arith.constant 0.000000e+00 : f32
    %6 = vector.broadcast %cst_5 : f32 to vector<8x128xf32>
    %7 = arith.maximumf %5, %6 : vector<8x128xf32>
    %c0_6 = arith.constant 0 : index
    %c0_7 = arith.constant 0 : index
    %8 = vector.load %arg5[%c0_6, %c0_7] : memref<128x256xf32, #tpu.memory_space<vmem>>, vector<128x256xf32>
    %cst_8 = arith.constant dense<0.000000e+00> : vector<8x256xf32>
    %9 = tpu.matmul %7, %8, %cst_8 {dimension_numbers = #tpu.dot_dimension_numbers<[1], [0], [0], [1], [0, 0, 1, 1], [], []>} : vector<8x128xf32>, vector<128x256xf32>, vector<8x256xf32> -> vector<8x256xf32>
    %c0_9 = arith.constant 0 : index
    %c0_10 = arith.constant 0 : index
    %10 = vector.load %arg6[%c0_9, %c0_10] : memref<1x256xf32, #tpu.memory_space<vmem>>, vector<1x256xf32>
    %11 = vector.broadcast %10 : vector<1x256xf32> to vector<8x256xf32>
    %12 = arith.addf %9, %11 : vector<8x256xf32>
    %13 = vector.extract_strided_slice %12 {offsets = [0, 0], sizes = [8, 128], strides = [1, 1]} : vector<8x256xf32> to vector<8x128xf32>
    %14 = vector.extract_strided_slice %12 {offsets = [0, 128], sizes = [8, 128], strides = [1, 1]} : vector<8x256xf32> to vector<8x128xf32>
    %cst_11 = arith.constant 0.000000e+00 : f32
    %15 = vector.broadcast %cst_11 : f32 to vector<8x128xf32>
    %16 = arith.maximumf %14, %15 : vector<8x128xf32>
    %17 = math.absf %14 : vector<8x128xf32>
    %cst_12 = arith.constant 0.000000e+00 : f32
    %18 = vector.broadcast %cst_12 : f32 to vector<8x128xf32>
    %19 = arith.subf %18, %17 : vector<8x128xf32>
    %20 = math.exp %19 : vector<8x128xf32>
    %cst_13 = arith.constant 1.000000e+00 : f32
    %21 = vector.broadcast %cst_13 : f32 to vector<8x128xf32>
    %22 = arith.addf %21, %20 : vector<8x128xf32>
    %23 = math.log %22 : vector<8x128xf32>
    %24 = arith.addf %16, %23 : vector<8x128xf32>
    %c0_14 = arith.constant 0 : index
    %c0_15 = arith.constant 0 : index
    %25 = vector.load %arg2[%c0_14, %c0_15] : memref<8x128xf32, #tpu.memory_space<vmem>>, vector<8x128xf32>
    %26 = arith.mulf %25, %24 : vector<8x128xf32>
    %27 = arith.addf %13, %26 : vector<8x128xf32>
    %c0_16 = arith.constant 0 : index
    %c0_17 = arith.constant 0 : index
    %28 = vector.load %arg8[%c0_16, %c0_17] : memref<8x128xf32, #tpu.memory_space<vmem>>, vector<8x128xf32>
    tpu.vector_store %arg8[%c0_16, %c0_17], %27 {strides = array<i32>} : memref<8x128xf32, #tpu.memory_space<vmem>>, vector<8x128xf32>,
    %c0_18 = arith.constant 0 : index
    %c0_19 = arith.constant 0 : index
    %29 = vector.load %arg7[%c0_18, %c0_19] : memref<1x128xf32, #tpu.memory_space<vmem>>, vector<1x128xf32>
    %cst_20 = arith.constant 2.50662827 : f32
    %30 = vector.broadcast %cst_20 : f32 to vector<8x128xf32>
    %31 = arith.mulf %24, %30 : vector<8x128xf32>
    %32 = math.log %31 : vector<8x128xf32>
    %cst_21 = arith.constant 0.000000e+00 : f32
    %33 = vector.broadcast %cst_21 : f32 to vector<8x128xf32>
    %34 = arith.subf %33, %32 : vector<8x128xf32>
    %cst_22 = arith.constant 5.000000e-01 : f32
    %35 = vector.broadcast %cst_22 : f32 to vector<8x128xf32>
    %36 = arith.mulf %35, %25 : vector<8x128xf32>
    %37 = arith.mulf %36, %25 : vector<8x128xf32>
    %38 = arith.subf %34, %37 : vector<8x128xf32>
    %39 = vector.broadcast %29 : vector<1x128xf32> to vector<8x128xf32>
    %40 = arith.mulf %38, %39 : vector<8x128xf32>
    %cst_23 = arith.constant dense<0.000000e+00> : vector<8xf32>
    %41 = vector.multi_reduction <add>, %40, %cst_23 [1] : vector<8x128xf32> to vector<8xf32>
    %42 = vector.shape_cast %41 : vector<8xf32> to vector<8x1xf32>
    %43 = vector.shape_cast %42 : vector<8x1xf32> to vector<8x1xf32>
    %44 = vector.broadcast %43 : vector<8x1xf32> to vector<8x128xf32>
    %c0_24 = arith.constant 0 : index
    %c0_25 = arith.constant 0 : index
    %45 = vector.load %arg9[%c0_24, %c0_25] : memref<8x128xf32, #tpu.memory_space<vmem>>, vector<8x128xf32>
    tpu.vector_store %arg9[%c0_24, %c0_25], %44 {strides = array<i32>} : memref<8x128xf32, #tpu.memory_space<vmem>>, vector<8x128xf32>,
    return
  }
  func.func @transform_0(%arg0: i32) -> (i32, i32) {
    %c0_i32 = arith.constant 0 : i32
    %c0_i32_0 = arith.constant 0 : i32
    return %arg0, %c0_i32 : i32, i32
  }
  func.func @transform_1(%arg0: i32) -> (i32, i32) {
    %c0_i32 = arith.constant 0 : i32
    %c0_i32_0 = arith.constant 0 : i32
    return %arg0, %c0_i32 : i32, i32
  }
  func.func @transform_2(%arg0: i32) -> (i32, i32) {
    %c0_i32 = arith.constant 0 : i32
    %c0_i32_0 = arith.constant 0 : i32
    %c0_i32_1 = arith.constant 0 : i32
    return %c0_i32, %c0_i32_0 : i32, i32
  }
  func.func @transform_3(%arg0: i32) -> (i32, i32) {
    %c0_i32 = arith.constant 0 : i32
    %c0_i32_0 = arith.constant 0 : i32
    %c0_i32_1 = arith.constant 0 : i32
    return %c0_i32, %c0_i32_0 : i32, i32
  }
  func.func @transform_4(%arg0: i32) -> (i32, i32) {
    %c0_i32 = arith.constant 0 : i32
    %c0_i32_0 = arith.constant 0 : i32
    %c0_i32_1 = arith.constant 0 : i32
    return %c0_i32, %c0_i32_0 : i32, i32
  }
  func.func @transform_5(%arg0: i32) -> (i32, i32) {
    %c0_i32 = arith.constant 0 : i32
    %c0_i32_0 = arith.constant 0 : i32
    %c0_i32_1 = arith.constant 0 : i32
    return %c0_i32, %c0_i32_0 : i32, i32
  }
  func.func @transform_6(%arg0: i32) -> (i32, i32) {
    %c0_i32 = arith.constant 0 : i32
    %c0_i32_0 = arith.constant 0 : i32
    %c0_i32_1 = arith.constant 0 : i32
    return %c0_i32, %c0_i32_0 : i32, i32
  }
  func.func @transform_7(%arg0: i32) -> (i32, i32) {
    %c0_i32 = arith.constant 0 : i32
    %c0_i32_0 = arith.constant 0 : i32
    return %arg0, %c0_i32 : i32, i32
  }
  func.func @transform_8(%arg0: i32) -> (i32, i32) {
    %c0_i32 = arith.constant 0 : i32
    %c0_i32_0 = arith.constant 0 : i32
    return %arg0, %c0_i32 : i32, i32
  }
}

</mosaic_0001>

<llo_original>
// kernel: tpu_custom_call.1
$region0: #{tpu_custom_call.1}
  #allocation0 [shape = 'u32[]', space=smem, size = 0x4, offset = 0x4, fixed_abs, tag = 'smem constant byte address 0x4 - core index']
  #allocation1 [shape = 'u32[144,128]{1,0:T(1,128)}', space=vmem, size = 0x12000, scoped, tag = 'internal scratch']
  %s0 = inlined_call_operand.hbm [shape: f32[8,128], index: 0, kind: input, shape index: {}]
  %s1 = inlined_call_operand.hbm [shape: f32[8,128], index: 1, kind: input, shape index: {}]
  %s2 = inlined_call_operand.hbm [shape: f32[128,128], index: 2, kind: input, shape index: {}]
  %s3 = inlined_call_operand.vmem [shape: f32[1,128], index: 3, kind: input, shape index: {}]
  %s4 = inlined_call_operand.hbm [shape: f32[128,256], index: 4, kind: input, shape index: {}]
  %s5 = inlined_call_operand.vmem [shape: f32[1,256], index: 5, kind: input, shape index: {}]
  %s6 = inlined_call_operand.vmem [shape: f32[1,128], index: 6, kind: input, shape index: {}]
  %s7 = inlined_call_operand.hbm [shape: f32[8,128], index: 7, kind: output, shape index: {0}]
  %s8 = inlined_call_operand.hbm [shape: f32[8,128], index: 8, kind: output, shape index: {1}]
  %9 = xla_tuple %s7, %s8
  %s10 = sld [smem:[#allocation0]]
  $region62: #{tpu_custom_call.1} parent=0
    _
  %s12 = ssub.s32 1, %s10
  %s13 = scalar_select 0, %s12, %s10
  $region1: #{tpu_custom_call.1} parent=0
    #allocation2 [shape = 'u8[4096]{0}', space=vmem, size = 0x1000, scoped, tag = 'input window, operand 0, single buffered']
    #allocation3 [shape = 's32[1]{0}', space=sflag, size = 0x4, scoped, tag = 'scoped memory for tpu_custom_call.1']
    #allocation4 [shape = 's32[1]{0}', space=sflag, size = 0x4, scoped, tag = 'scoped memory for tpu_custom_call.1']
    #allocation5 [shape = 'u8[4096]{0}', space=vmem, size = 0x1000, scoped, tag = 'input window, operand 1, single buffered']
    #allocation6 [shape = 's32[1]{0}', space=sflag, size = 0x4, scoped, tag = 'scoped memory for tpu_custom_call.1']
    #allocation7 [shape = 'u8[65536]{0}', space=vmem, size = 0x10000, scoped, tag = 'input window, operand 2, single buffered']
    #allocation8 [shape = 'u8[131072]{0}', space=vmem, size = 0x20000, scoped, tag = 'input window, operand 4, single buffered']
    #allocation9 [shape = 's32[1]{0}', space=sflag, size = 0x4, scoped, tag = 'scoped memory for tpu_custom_call.1']
    #allocation10 [shape = 'u8[4096]{0}', space=vmem, size = 0x1000, scoped, tag = 'output window, operand 0, single buffered']
    #allocation11 [shape = 'u8[4096]{0}', space=vmem, size = 0x1000, scoped, tag = 'output window, operand 1, single buffered']
    #allocation12 [shape = 's32[1]{0}', space=sflag, size = 0x4, scoped, tag = 'scoped memory for tpu_custom_call.1']
    %14 = vsyncpa [#allocation3], 0
    %15 = vsyncpa [#allocation6], 0
    %16 = vsyncpa [#allocation9], 0
    %17 = vsyncpa [#allocation4], 0
    %18 = vsyncpa [#allocation12], 0
    // Predicated region
    $region2: #{tpu_custom_call.1} parent=1 // pred_check
      _
    $region3: #{tpu_custom_call.1} parent=1 // pred_check_branch
      %20 = sbr.rel (0) target = $region5
    $region4: #{tpu_custom_call.1} parent=1 // pred_region
      %s22 = ssub.s32 128, 128
      %23 = vsyncadd [#allocation3], %s22
      %s25 = sshll.u32 [#allocation2], 4
      %s26 = int_to_ptr.vmem [resolvable:$true] %s25
      %28 = dma.hbm_to_vmem [thread:$0]  %s0, 128, %s26, [#allocation3]
    $region5: #{tpu_custom_call.1} parent=1 // pred_fallthru
      _
    // Predicated region
    $region6: #{tpu_custom_call.1} parent=1 // pred_check
      _
    $region7: #{tpu_custom_call.1} parent=1 // pred_check_branch
      %30 = sbr.rel (0) target = $region9
    $region8: #{tpu_custom_call.1} parent=1 // pred_region
      %s32 = ssub.s32 128, 128
      %33 = vsyncadd [#allocation6], %s32
      %s35 = sshll.u32 [#allocation5], 4
      %s36 = int_to_ptr.vmem [resolvable:$true] %s35
      %38 = dma.hbm_to_vmem [thread:$0]  %s1, 128, %s36, [#allocation6]
    $region9: #{tpu_custom_call.1} parent=1 // pred_fallthru
      _
    // Predicated region
    $region10: #{tpu_custom_call.1} parent=1 // pred_check
      _
    $region11: #{tpu_custom_call.1} parent=1 // pred_check_branch
      %40 = sbr.rel (0) target = $region13
    $region12: #{tpu_custom_call.1} parent=1 // pred_region
      %s42 = ssub.s32 2048, 2048
      %43 = vsyncadd [#allocation6], %s42
      %s44 = sshll.u32 [#allocation7], 4
      %s45 = int_to_ptr.vmem [resolvable:$true] %s44
      %50 = dma.hbm_to_vmem [thread:$0]  %s2, 2048, %s45, [#allocation6], 128, 128, 8
    $region13: #{tpu_custom_call.1} parent=1 // pred_fallthru
      _
    // Predicated region
    $region14: #{tpu_custom_call.1} parent=1 // pred_check
      _
    $region15: #{tpu_custom_call.1} parent=1 // pred_check_branch
      %52 = sbr.rel (0) target = $region17
    $region16: #{tpu_custom_call.1} parent=1 // pred_region
      _
    $region17: #{tpu_custom_call.1} parent=1 // pred_fallthru
      _
    // Predicated region
    $region18: #{tpu_custom_call.1} parent=1 // pred_check
      _
    $region19: #{tpu_custom_call.1} parent=1 // pred_check_branch
      %54 = sbr.rel (0) target = $region21
    $region20: #{tpu_custom_call.1} parent=1 // pred_region
      %s56 = ssub.s32 4096, 4096
      %57 = vsyncadd [#allocation9], %s56
      %s58 = sshll.u32 [#allocation8], 4
      %s59 = int_to_ptr.vmem [resolvable:$true] %s58
      %64 = dma.hbm_to_vmem [thread:$0]  %s4, 4096, %s59, [#allocation9], 256, 256, 16
    $region21: #{tpu_custom_call.1} parent=1 // pred_fallthru
      _
    // Predicated region
    $region22: #{tpu_custom_call.1} parent=1 // pred_check
      _
    $region23: #{tpu_custom_call.1} parent=1 // pred_check_branch
      %66 = sbr.rel (0) target = $region25
    $region24: #{tpu_custom_call.1} parent=1 // pred_region
      _
    $region25: #{tpu_custom_call.1} parent=1 // pred_fallthru
      _
    // Predicated region
    $region26: #{tpu_custom_call.1} parent=1 // pred_check
      _
    $region27: #{tpu_custom_call.1} parent=1 // pred_check_branch
      %68 = sbr.rel (0) target = $region29
    $region28: #{tpu_custom_call.1} parent=1 // pred_region
      _
    $region29: #{tpu_custom_call.1} parent=1 // pred_fallthru
      _
    // Predicated region
    $region30: #{tpu_custom_call.1} parent=1 // pred_check
      _
    $region31: #{tpu_custom_call.1} parent=1 // pred_check_branch
      %70 = sbr.rel (0) target = $region33
    $region32: #{tpu_custom_call.1} parent=1 // pred_region
      %71 = dma.done [#allocation3], 128
    $region33: #{tpu_custom_call.1} parent=1 // pred_fallthru
      _
    // Predicated region
    $region34: #{tpu_custom_call.1} parent=1 // pred_check
      _
    $region35: #{tpu_custom_call.1} parent=1 // pred_check_branch
      %73 = sbr.rel (0) target = $region37
    $region36: #{tpu_custom_call.1} parent=1 // pred_region
      %74 = dma.done [#allocation6], 128
    $region37: #{tpu_custom_call.1} parent=1 // pred_fallthru
      _
    // Predicated region
    $region38: #{tpu_custom_call.1} parent=1 // pred_check
      _
    $region39: #{tpu_custom_call.1} parent=1 // pred_check_branch
      %76 = sbr.rel (0) target = $region41
    $region40: #{tpu_custom_call.1} parent=1 // pred_region
      %77 = dma.done [#allocation6], 2048
    $region41: #{tpu_custom_call.1} parent=1 // pred_fallthru
      _
    // Predicated region
    $region42: #{tpu_custom_call.1} parent=1 // pred_check
      _
    $region43: #{tpu_custom_call.1} parent=1 // pred_check_branch
      %79 = sbr.rel (0) target = $region45
    $region44: #{tpu_custom_call.1} parent=1 // pred_region
      %80 = dma.done [#allocation9], 4096
    $region45: #{tpu_custom_call.1} parent=1 // pred_fallthru
      _
    %v81 = vld [vmem:[#allocation2] sm:$0xff]
    %v82 = vld [vmem:[#allocation7] sm:$0xff]
    %v83 = vld [vmem:[#allocation7 + $0x8] sm:$0xff]
    %v84 = vld [vmem:[#allocation7 + $0x10] sm:$0xff]
    %v85 = vld [vmem:[#allocation7 + $0x18] sm:$0xff]
    %v86 = vld [vmem:[#allocation7 + $0x20] sm:$0xff]
    %v87 = vld [vmem:[#allocation7 + $0x28] sm:$0xff]
    %v88 = vld [vmem:[#allocation7 + $0x30] sm:$0xff]
    %v89 = vld [vmem:[#allocation7 + $0x38] sm:$0xff]
    %v90 = vld [vmem:[#allocation7 + $0x40] sm:$0xff]
    %v91 = vld [vmem:[#allocation7 + $0x48] sm:$0xff]
    %v92 = vld [vmem:[#allocation7 + $0x50] sm:$0xff]
    %v93 = vld [vmem:[#allocation7 + $0x58] sm:$0xff]
    %v94 = vld [vmem:[#allocation7 + $0x60] sm:$0xff]
    %v95 = vld [vmem:[#allocation7 + $0x68] sm:$0xff]
    %v96 = vld [vmem:[#allocation7 + $0x70] sm:$0xff]
    %v97 = vld [vmem:[#allocation7 + $0x78] sm:$0xff]
    %v98 = vld [vmem:[%s3] sm:$0x1]
    %v100 = vlaneseq
    %v101 = vshrl.u32 %v100, 7
    %v102 = vsub.s32 0, %v101
    %v103 = vrot.slane %v98, %v102
    %105 = vmatprep.subr.mxu0 0.0
    %106 = vmatpush1.msra.mxu0 %v97
    %107 = vmatprep.subr.mxu0 0.0
    %108 = vmatpush1.msra.mxu0 %v96
    %109 = vmatprep.subr.mxu0 0.0
    %110 = vmatpush1.msra.mxu0 %v95
    %111 = vmatprep.subr.mxu0 0.0
    %112 = vmatpush1.msra.mxu0 %v94
    %113 = vmatprep.subr.mxu0 0.0
    %114 = vmatpush1.msra.mxu0 %v93
    %115 = vmatprep.subr.mxu0 0.0
    %116 = vmatpush1.msra.mxu0 %v92
    %117 = vmatprep.subr.mxu0 0.0
    %118 = vmatpush1.msra.mxu0 %v91
    %119 = vmatprep.subr.mxu0 0.0
    %120 = vmatpush1.msra.mxu0 %v90
    %121 = vmatprep.subr.mxu0 0.0
    %122 = vmatpush1.msra.mxu0 %v89
    %123 = vmatprep.subr.mxu0 0.0
    %124 = vmatpush1.msra.mxu0 %v88
    %125 = vmatprep.subr.mxu0 0.0
    %126 = vmatpush1.msra.mxu0 %v87
    %127 = vmatprep.subr.mxu0 0.0
    %128 = vmatpush1.msra.mxu0 %v86
    %129 = vmatprep.subr.mxu0 0.0
    %130 = vmatpush1.msra.mxu0 %v85
    %131 = vmatprep.subr.mxu0 0.0
    %132 = vmatpush1.msra.mxu0 %v84
    %133 = vmatprep.subr.mxu0 0.0
    %134 = vmatpush1.msra.mxu0 %v83
    %135 = vmatprep.subr.mxu0 0.0
    %136 = vmatpush1.msra.mxu0 %v82
    %137 = vmatprep.subr.mxu0 0.0
    %138 = vmatpush2.msra.mxu0 0.0
    %139 = vmatprep.subr.mxu0 0.0
    %140 = vmatpush2.msra.mxu0 0.0
    %141 = vmatprep.subr.mxu0 0.0
    %142 = vmatpush2.msra.mxu0 0.0
    %143 = vmatprep.subr.mxu0 0.0
    %144 = vmatpush2.msra.mxu0 0.0
    %145 = vmatprep.subr.mxu0 0.0
    %146 = vmatpush2.msra.mxu0 0.0
    %147 = vmatprep.subr.mxu0 0.0
    %148 = vmatpush2.msra.mxu0 0.0
    %149 = vmatprep.subr.mxu0 0.0
    %150 = vmatpush2.msra.mxu0 0.0
    %151 = vmatprep.subr.mxu0 0.0
    %152 = vmatpush2.msra.mxu0 0.0
    %153 = vmatprep.subr.mxu0 0.0
    %154 = vmatpush2.msra.mxu0 0.0
    %155 = vmatprep.subr.mxu0 0.0
    %156 = vmatpush2.msra.mxu0 0.0
    %157 = vmatprep.subr.mxu0 0.0
    %158 = vmatpush2.msra.mxu0 0.0
    %159 = vmatprep.subr.mxu0 0.0
    %160 = vmatpush2.msra.mxu0 0.0
    %161 = vmatprep.subr.mxu0 0.0
    %162 = vmatpush2.msra.mxu0 0.0
    %163 = vmatprep.subr.mxu0 0.0
    %164 = vmatpush2.msra.mxu0 0.0
    %165 = vmatprep.subr.mxu0 0.0
    %166 = vmatpush2.msra.mxu0 0.0
    %167 = vmatprep.subr.mxu0 0.0
    %168 = vmatpush2.msra.mxu0 0.0
    %169 = vmatprep.mubr.f32.mxu0 0.0
    %170 = vmatmul.mubr.f32.gmra.mxu0 %v81
    %v171 = vpop.f32.mrf.mxu0
    %v172 = vadd.f32 %v103, %v171
    %v173 = vpop.f32.mrf.mxu0
    %174 = vdwg.mxu0
    %v175 = vmax.f32 %v172, 0.0
    %v176 = vld [vmem:[#allocation8] sm:$0xff]
    %v177 = vld [vmem:[#allocation8 + $0x8] sm:$0xff]
    %v178 = vld [vmem:[#allocation8 + $0x10] sm:$0xff]
    %v179 = vld [vmem:[#allocation8 + $0x18] sm:$0xff]
    %v180 = vld [vmem:[#allocation8 + $0x20] sm:$0xff]
    %v181 = vld [vmem:[#allocation8 + $0x28] sm:$0xff]
    %v182 = vld [vmem:[#allocation8 + $0x30] sm:$0xff]
    %v183 = vld [vmem:[#allocation8 + $0x38] sm:$0xff]
    %v184 = vld [vmem:[#allocation8 + $0x40] sm:$0xff]
    %v185 = vld [vmem:[#allocation8 + $0x48] sm:$0xff]
    %v186 = vld [vmem:[#allocation8 + $0x50] sm:$0xff]
    %v187 = vld [vmem:[#allocation8 + $0x58] sm:$0xff]
    %v188 = vld [vmem:[#allocation8 + $0x60] sm:$0xff]
    %v189 = vld [vmem:[#allocation8 + $0x68] sm:$0xff]
    %v190 = vld [vmem:[#allocation8 + $0x70] sm:$0xff]
    %v191 = vld [vmem:[#allocation8 + $0x78] sm:$0xff]
    %v192 = vld [vmem:[#allocation8 + $0x80] sm:$0xff]
    %v193 = vld [vmem:[#allocation8 + $0x88] sm:$0xff]
    %v194 = vld [vmem:[#allocation8 + $0x90] sm:$0xff]
    %v195 = vld [vmem:[#allocation8 + $0x98] sm:$0xff]
    %v196 = vld [vmem:[#allocation8 + $0xa0] sm:$0xff]
    %v197 = vld [vmem:[#allocation8 + $0xa8] sm:$0xff]
    %v198 = vld [vmem:[#allocation8 + $0xb0] sm:$0xff]
    %v199 = vld [vmem:[#allocation8 + $0xb8] sm:$0xff]
    %v200 = vld [vmem:[#allocation8 + $0xc0] sm:$0xff]
    %v201 = vld [vmem:[#allocation8 + $0xc8] sm:$0xff]
    %v202 = vld [vmem:[#allocation8 + $0xd0] sm:$0xff]
    %v203 = vld [vmem:[#allocation8 + $0xd8] sm:$0xff]
    %v204 = vld [vmem:[#allocation8 + $0xe0] sm:$0xff]
    %v205 = vld [vmem:[#allocation8 + $0xe8] sm:$0xff]
    %v206 = vld [vmem:[#allocation8 + $0xf0] sm:$0xff]
    %v207 = vld [vmem:[#allocation8 + $0xf8] sm:$0xff]
    %v208 = vld [vmem:[%s5] sm:$0x3]
    %v210 = vlaneseq
    %v211 = vshrl.u32 %v210, 7
    %v212 = vsub.s32 0, %v211
    %v213 = vrot.slane %v208, %v212
    %v214 = vlaneseq
    %v215 = vshrl.u32 %v214, 7
    %v216 = vsub.s32 1, %v215
    %v217 = vrot.slane %v208, %v216
    %220 = vmatprep.subr.mxu0 %v207
    %221 = vmatpush1.msra.mxu0 %v206
    %222 = vmatprep.subr.mxu0 %v205
    %223 = vmatpush1.msra.mxu0 %v204
    %224 = vmatprep.subr.mxu0 %v203
    %225 = vmatpush1.msra.mxu0 %v202
    %226 = vmatprep.subr.mxu0 %v201
    %227 = vmatpush1.msra.mxu0 %v200
    %228 = vmatprep.subr.mxu0 %v199
    %229 = vmatpush1.msra.mxu0 %v198
    %230 = vmatprep.subr.mxu0 %v197
    %231 = vmatpush1.msra.mxu0 %v196
    %232 = vmatprep.subr.mxu0 %v195
    %233 = vmatpush1.msra.mxu0 %v194
    %234 = vmatprep.subr.mxu0 %v193
    %235 = vmatpush1.msra.mxu0 %v192
    %236 = vmatprep.subr.mxu0 %v191
    %237 = vmatpush1.msra.mxu0 %v190
    %238 = vmatprep.subr.mxu0 %v189
    %239 = vmatpush1.msra.mxu0 %v188
    %240 = vmatprep.subr.mxu0 %v187
    %241 = vmatpush1.msra.mxu0 %v186
    %242 = vmatprep.subr.mxu0 %v185
    %243 = vmatpush1.msra.mxu0 %v184
    %244 = vmatprep.subr.mxu0 %v183
    %245 = vmatpush1.msra.mxu0 %v182
    %246 = vmatprep.subr.mxu0 %v181
    %247 = vmatpush1.msra.mxu0 %v180
    %248 = vmatprep.subr.mxu0 %v179
    %249 = vmatpush1.msra.mxu0 %v178
    %250 = vmatprep.subr.mxu0 %v177
    %251 = vmatpush1.msra.mxu0 %v176
    %252 = vmatprep.subr.mxu0 0.0
    %253 = vmatpush2.msra.mxu0 0.0
    %254 = vmatprep.subr.mxu0 0.0
    %255 = vmatpush2.msra.mxu0 0.0
    %256 = vmatprep.subr.mxu0 0.0
    %257 = vmatpush2.msra.mxu0 0.0
    %258 = vmatprep.subr.mxu0 0.0
    %259 = vmatpush2.msra.mxu0 0.0
    %260 = vmatprep.subr.mxu0 0.0
    %261 = vmatpush2.msra.mxu0 0.0
    %262 = vmatprep.subr.mxu0 0.0
    %263 = vmatpush2.msra.mxu0 0.0
    %264 = vmatprep.subr.mxu0 0.0
    %265 = vmatpush2.msra.mxu0 0.0
    %266 = vmatprep.subr.mxu0 0.0
    %267 = vmatpush2.msra.mxu0 0.0
    %268 = vmatprep.subr.mxu0 0.0
    %269 = vmatpush2.msra.mxu0 0.0
    %270 = vmatprep.subr.mxu0 0.0
    %271 = vmatpush2.msra.mxu0 0.0
    %272 = vmatprep.subr.mxu0 0.0
    %273 = vmatpush2.msra.mxu0 0.0
    %274 = vmatprep.subr.mxu0 0.0
    %275 = vmatpush2.msra.mxu0 0.0
    %276 = vmatprep.subr.mxu0 0.0
    %277 = vmatpush2.msra.mxu0 0.0
    %278 = vmatprep.subr.mxu0 0.0
    %279 = vmatpush2.msra.mxu0 0.0
    %280 = vmatprep.subr.mxu0 0.0
    %281 = vmatpush2.msra.mxu0 0.0
    %282 = vmatprep.subr.mxu0 0.0
    %283 = vmatpush2.msra.mxu0 0.0
    %284 = vmatprep.mubr.f32.mxu0 0.0
    %285 = vmatmul.mubr.f32.gmra.mxu0 %v175
    %v286 = vpop.f32.mrf.mxu0
    %v287 = vadd.f32 %v213, %v286
    %v288 = vpop.f32.mrf.mxu0
    %v289 = vadd.f32 %v217, %v288
    %290 = vdwg.mxu0
    %v291 = vmax.f32 %v289, 0.0
    %v292 = vand.u32 2147483647, %v289
    %v293 = vsub.f32 0.0, %v292
    %v294 = vmul.f32 %v293, 1.442695
    %v295 = vpow.pop %v294
    %v296 = vadd.f32 %v295, 1.0
    %v297 = vlog2.pop %v296
    %v298 = vmul.f32 %v297, 0.6931472
    %v299 = vadd.f32 %v291, %v298
    %v300 = vld [vmem:[#allocation5] sm:$0xff]
    %v301 = vmul.f32 %v300, %v299
    %v302 = vadd.f32 %v287, %v301
    %303 = vst [vmem:[#allocation10] sm:$0xff] %v302
    %v304 = vld [vmem:[%s6] sm:$0x1]
    %v305 = vmul.f32 %v299, 2.5066283
    %v306 = vlog2.pop %v305
    %v307 = vmul.f32 %v306, 0.6931472
    %v308 = vsub.f32 0.0, %v307
    %v309 = vmul.f32 %v300, 0.5
    %v310 = vmul.f32 %v309, %v300
    %v311 = vsub.f32 %v308, %v310
    %v313 = vlaneseq
    %v314 = vshrl.u32 %v313, 7
    %v315 = vsub.s32 0, %v314
    %v316 = vrot.slane %v304, %v315
    %v318 = vmul.f32 %v311, %v316
    %319 = vadd.xlane.f32.xlu0 %v318
    %v320 = vpop.xlane.xlu0 %319
    %321 = vst [vmem:[#allocation11] sm:$0xff] %v320
    // Predicated region
    $region46: #{tpu_custom_call.1} parent=1 // pred_check
      _
    $region47: #{tpu_custom_call.1} parent=1 // pred_check_branch
      %323 = sbr.rel (0) target = $region49
    $region48: #{tpu_custom_call.1} parent=1 // pred_region
      %s325 = ssub.s32 128, 128
      %326 = vsyncadd [#allocation4], %s325
      %s328 = sshll.u32 [#allocation10], 4
      %s329 = int_to_ptr.vmem [resolvable:$true] %s328
      %331 = dma.vmem_to_hbm [thread:$0]  %s329, 128, %s7, [#allocation4]
    $region49: #{tpu_custom_call.1} parent=1 // pred_fallthru
      _
    // Predicated region
    $region50: #{tpu_custom_call.1} parent=1 // pred_check
      _
    $region51: #{tpu_custom_call.1} parent=1 // pred_check_branch
      %333 = sbr.rel (0) target = $region53
    $region52: #{tpu_custom_call.1} parent=1 // pred_region
      %s335 = ssub.s32 128, 128
      %336 = vsyncadd [#allocation12], %s335
      %s338 = sshll.u32 [#allocation11], 4
      %s339 = int_to_ptr.vmem [resolvable:$true] %s338
      %341 = dma.vmem_to_hbm [thread:$0]  %s339, 128, %s8, [#allocation12]
    $region53: #{tpu_custom_call.1} parent=1 // pred_fallthru
      _
    // Predicated region
    $region54: #{tpu_custom_call.1} parent=1 // pred_check
      _
    $region55: #{tpu_custom_call.1} parent=1 // pred_check_branch
      %343 = sbr.rel (0) target = $region57
    $region56: #{tpu_custom_call.1} parent=1 // pred_region
      %344 = dma.done [#allocation4], 128
    $region57: #{tpu_custom_call.1} parent=1 // pred_fallthru
      _
    // Predicated region
    $region58: #{tpu_custom_call.1} parent=1 // pred_check
      _
    $region59: #{tpu_custom_call.1} parent=1 // pred_check_branch
      %346 = sbr.rel (0) target = $region61
    $region60: #{tpu_custom_call.1} parent=1 // pred_region
      %347 = dma.done [#allocation12], 128
    $region61: #{tpu_custom_call.1} parent=1 // pred_fallthru
      _
    %348 = vsyncpa [#allocation3], 1
    %349 = vsyncpa [#allocation6], 1
    %350 = vsyncpa [#allocation9], 1
    %351 = vsyncpa [#allocation4], 1
    %352 = vsyncpa [#allocation12], 1

</llo_original>
